<compile_context>
chip_gen: v6e
topology: v6e:2x2x1
jax: 0.10.0
libtpu: 0.0.40
codegen_flags: <defaults>
</compile_context>

<pallas_src>
import jax
import jax.numpy as jnp
from jax import lax
from jax.experimental import pallas as pl
from jax.experimental.pallas import tpu as pltpu


# ----------------------------------------------------------------------------
# small helpers
# ----------------------------------------------------------------------------
def _cdiv(a, b):
    return -(-a // b)


def _round_up(a, b):
    return _cdiv(a, b) * b


def _sublane_unit(dtype):
    """Sublane row granularity: 8 rows for 4-byte, 16 for 2-byte, 32 for 1-byte."""
    ib = jnp.dtype(dtype).itemsize
    return 8 * max(1, 4 // ib)


def _vmem_budget():
    """(per-step live-VMEM tile budget, vmem_limit_bytes) for this generation."""
    cap = None
    try:
        cap = getattr(pltpu.get_tpu_info(), "vmem_capacity_bytes", None)
    except Exception:
        cap = None
    if cap is None:
        cap = 64 * 1024 * 1024                      # conservative default (v7x-like)
    if cap >= 96 * 1024 * 1024:                     # v5e / v6e: 128 MiB physical
        return 48 * 1024 * 1024, 100 * 1024 * 1024
    return 20 * 1024 * 1024, 44 * 1024 * 1024       # v7x: 64 MiB physical


def _fused_tile_m(M, per_row_bytes, budget, unit, target_steps=8,
                  min_block_bytes=512 * 1024):
    """M-axis tile for the fused kernel, or None if even a unit tile won't fit."""
    cap_rows = budget // max(per_row_bytes, 1)
    if cap_rows < min(M, unit):
        return None
    tm_max = M if cap_rows >= M else (cap_rows // unit) * unit
    # Keep ~target_steps grid steps alive (DMA pipelining + v7x megacore) but
    # don't let blocks fall below ~min_block_bytes (per-step overhead).
    tm_want = _round_up(_cdiv(M, target_steps), unit)
    tm_min = _round_up(_cdiv(min_block_bytes, max(per_row_bytes, 1)), unit)
    tm = max(tm_want, tm_min)
    tm = min(tm, tm_max, _round_up(M, unit))
    return M if tm >= M else tm


def _choose_tms(M, unit, target_tiles=8):
    """M tile for the two-pass stats kernel (outer parallel axis)."""
    if M <= unit:
        return M
    return min(M, _round_up(_cdiv(M, target_tiles), unit))


def _choose_tf(F, G, TMS, ib, budget):
    """F (lane) tile for the two-pass stats kernel. Multiple of 128, or full F."""
    if F <= 128:
        return F
    per_lane = 2 * G * TMS * ib + 12 * TMS + 8      # dbuf input + f32 temps
    cap = budget // max(per_lane, 1)
    if cap >= F:
        return F
    tf = max(128, (cap // 128) * 128)
    return min(tf, _round_up(F, 128))


def _choose_tb(N, CHW, HW, ib, budget, unit):
    """Batch-row tile for the assemble kernel."""
    per_row = 2 * CHW * ib + 2 * (CHW + HW) * ib + 4 * HW + 8
    cap = budget // max(per_row, 1)
    if cap >= N:
        return N
    if cap >= unit:
        return (cap // unit) * unit
    return min(N, unit)     # mild budget overshoot; vmem_limit is the hard cap


# ----------------------------------------------------------------------------
# Fused kernel: streamed per-slice avg-std + output assembly in one pass.
#   x_ref: (G, TM, F)     o_ref: (G, TM, F + HW)
# ----------------------------------------------------------------------------
def _make_fused_kernel(HW, eps):
    def kernel(x_ref, o_ref):
        g_total, tm, f = x_ref.shape
        inv_g = 1.0 / g_total
        inv_f = 1.0 / f
        zeros = jnp.zeros((tm, f), jnp.float32)

        # Streamed G-reduction: never materialize (G, TM, F) f32 temporaries.
        def sum_body(g, acc):
            return acc + x_ref[g].astype(jnp.float32)

        mu = lax.fori_loop(0, g_total, sum_body, zeros, unroll=True) * inv_g

        def ss_body(g, acc):
            d = x_ref[g].astype(jnp.float32) - mu
            return acc + d * d

        ss = lax.fori_loop(0, g_total, ss_body, zeros, unroll=True)

        std = jnp.sqrt(ss * inv_g + eps)                          # (TM, F)
        avg = jnp.sum(std, axis=-1, keepdims=True) * inv_f        # (TM, 1)
        std_ch = jnp.broadcast_to(avg, (tm, HW)).astype(o_ref.dtype)

        # One lane-dense whole-row store per group entry (avoids two partial
        # stores at the F lane boundary).
        for g in range(g_total):
            o_ref[g] = jnp.concatenate(
                [x_ref[g].astype(o_ref.dtype), std_ch], axis=-1)

    return kernel


def _fused_path(x, G, M, C, H, W, HW, F, TM, eps, vmem_limit):
    N = G * M
    ib = x.dtype.itemsize
    xg = x.reshape(G, M, F)
    out = pl.pallas_call(
        _make_fused_kernel(HW, eps),
        grid=(_cdiv(M, TM),),
        in_specs=[pl.BlockSpec((G, TM, F), lambda m: (0, m, 0))],
        # NOTE: if profiling shows exposed input DMA on v6e, pass
        # pipeline_mode=pl.Buffered(3) on the input BlockSpec above.
        out_specs=pl.BlockSpec((G, TM, F + HW), lambda m: (0, m, 0)),
        out_shape=jax.ShapeDtypeStruct((G, M, F + HW), x.dtype),
        compiler_params=pltpu.CompilerParams(
            dimension_semantics=("parallel",),
            vmem_limit_bytes=vmem_limit),
        cost_estimate=pl.CostEstimate(
            flops=3 * G * M * F,
            transcendentals=M * F,
            bytes_accessed=2 * int(x.nbytes) + N * HW * ib),
    )(xg)
    return out.reshape(N, C + 1, H, W)


# ----------------------------------------------------------------------------
# Fallback kernel 1: per-slice average std, tiled over (M, F) with accumulation.
#   x_ref: (G, TMS, TF)    y_ref: (TMS, 1) f32   (resident across the F axis)
# ----------------------------------------------------------------------------
def _make_stats_kernel(eps, inv_f, F, TF):
    need_mask = (F % TF) != 0

    def kernel(x_ref, y_ref):
        fi = pl.program_id(1)

        @pl.when(fi == 0)
        def _():
            y_ref[...] = jnp.zeros_like(y_ref)

        g_total, tms, tf = x_ref.shape
        inv_g = 1.0 / g_total
        zeros = jnp.zeros((tms, tf), jnp.float32)

        def sum_body(g, acc):
            return acc + x_ref[g].astype(jnp.float32)

        mu = lax.fori_loop(0, g_total, sum_body, zeros, unroll=True) * inv_g

        def ss_body(g, acc):
            d = x_ref[g].astype(jnp.float32) - mu
            return acc + d * d

        ss = lax.fori_loop(0, g_total, ss_body, zeros, unroll=True)

        std = jnp.sqrt(ss * inv_g + eps)                          # (TMS, TF)
        if need_mask:   # short last F tile: zero out padded lanes
            lane = lax.broadcasted_iota(jnp.int32, (tms, tf), 1) + fi * TF
            std = jnp.where(lane < F, std, 0.0)
        y_ref[...] += jnp.sum(std, axis=-1, keepdims=True)

        @pl.when(fi == pl.num_programs(1) - 1)
        def _():
            y_ref[...] = y_ref[...] * inv_f

    return kernel


# ----------------------------------------------------------------------------
# Fallback kernel 2: assemble [x, broadcast(avg_std)] with lane-dense rows.
#   x_ref: (TB, C*HW)   y_ref: (TB, 1) f32   o_ref: (TB, (C+1)*HW)
# ----------------------------------------------------------------------------
def _make_assemble_kernel(HW):
    def kernel(x_ref, y_ref, o_ref):
        tb = x_ref.shape[0]
        std_ch = jnp.broadcast_to(y_ref[...], (tb, HW)).astype(o_ref.dtype)
        o_ref[...] = jnp.concatenate(
            [x_ref[...].astype(o_ref.dtype), std_ch], axis=-1)

    return kernel


def _two_pass_path(x, G, M, C, H, W, HW, F, eps, budget, vmem_limit, unit):
    N = G * M
    CHW = C * HW
    ib = x.dtype.itemsize

    # --- pass 1: per-slice average std (M parallel x F arbitrary) -----------
    TMS = _choose_tms(M, unit)
    TF = _choose_tf(F, G, TMS, ib, budget)
    xg = x.reshape(G, M, F)
    y = pl.pallas_call(
        _make_stats_kernel(eps, 1.0 / F, F, TF),
        grid=(_cdiv(M, TMS), _cdiv(F, TF)),
        in_specs=[pl.BlockSpec((G, TMS, TF), lambda mi, fi: (0, mi, fi))],
        out_specs=pl.BlockSpec((TMS, 1), lambda mi, fi: (mi, 0)),
        out_shape=jax.ShapeDtypeStruct((M, 1), jnp.float32),
        compiler_params=pltpu.CompilerParams(
            dimension_semantics=("parallel", "arbitrary"),
            vmem_limit_bytes=vmem_limit),
        cost_estimate=pl.CostEstimate(
            flops=3 * G * M * F,
            transcendentals=M * F,
            bytes_accessed=int(x.nbytes) + 4 * M),
    )(xg)

    # per-batch-element std: element n belongs to slice n % M
    y_n = jnp.tile(y, (G, 1))                                 # (N, 1) f32

    # --- pass 2: concat [x, broadcast(avg_std)], lane-dense ------------------
    TB = _choose_tb(N, CHW, HW, ib, budget, unit)
    x2 = x.reshape(N, CHW)
    out = pl.pallas_call(
        _make_assemble_kernel(HW),
        grid=(_cdiv(N, TB),),
        in_specs=[
            pl.BlockSpec((TB, CHW), lambda b: (b, 0)),
            pl.BlockSpec((TB, 1), lambda b: (b, 0)),
        ],
        out_specs=pl.BlockSpec((TB, CHW + HW), lambda b: (b, 0)),
        out_shape=jax.ShapeDtypeStruct((N, CHW + HW), x.dtype),
        compiler_params=pltpu.CompilerParams(
            dimension_semantics=("parallel",),
            vmem_limit_bytes=vmem_limit),
        cost_estimate=pl.CostEstimate(
            flops=0,
            transcendentals=0,
            bytes_accessed=int(x.nbytes) + N * (CHW + HW) * ib),
    )(x2, y_n)
    return out.reshape(N, C + 1, H, W)


# ----------------------------------------------------------------------------
# Public wrapper (forward pass of MinibatchStd)
# ----------------------------------------------------------------------------
def minibatch_std(x, group_size=4, eps=1e-8, *, force_two_pass=False,
                  tile_budget_bytes=None):
    N, C, H, W = x.shape
    G = N if (group_size is None or group_size <= 0) else group_size
    assert G != 1, "Can not use 1 as minibatch std group size."
    assert N >= G, "Batch smaller than group size."
    assert N % G == 0, "Batch not divisible by group size."
    M = N // G
    HW = H * W
    F = C * HW
    ib = x.dtype.itemsize
    unit = _sublane_unit(x.dtype)

    budget, vmem_limit = _vmem_budget()
    if tile_budget_bytes is not None:
        budget = tile_budget_bytes

    if not force_two_pass:
        # per-M-row footprint of the fused kernel: double-buffered input +
        # double-buffered output blocks + f32 accumulators (streamed, so only
        # ~(TM, F)-sized temporaries, not (G, TM, F)).
        per_row = 2 * G * F * ib + 2 * G * (F + HW) * ib + 16 * (F + HW)
        tm = _fused_tile_m(M, per_row, budget, unit)
        if tm is not None:
            return _fused_path(x, G, M, C, H, W, HW, F, tm, eps, vmem_limit)

    return _two_pass_path(x, G, M, C, H, W, HW, F, eps, budget, vmem_limit, unit)


# ----------------------------------------------------------------------------
# Pure-JAX reference (mirrors the PyTorch forward)
# ----------------------------------------------------------------------------
def _ref_minibatch_std(x, group_size=4, eps=1e-8):
    N, C, H, W = x.shape
    G = N if (group_size is None or group_size <= 0) else group_size
    M = N // G
    y = x.reshape(G, M, C, H, W).astype(jnp.float32)
    y = y - jnp.mean(y, axis=0, keepdims=True)
    y = jnp.mean(y ** 2, axis=0)
    y = jnp.sqrt(y + eps)
    y = jnp.mean(y.reshape(M, -1), axis=-1)              # (M,)
    y = jnp.tile(y, (G,)).astype(x.dtype)                # (N,)
    y = jnp.broadcast_to(y[:, None, None, None], (N, 1, H, W))
    return jnp.concatenate([x, y], axis=1)


if __name__ == "__main__":
    key = jax.random.PRNGKey(0)
    k1, k2, k3 = jax.random.split(key, 3)

    # 1) Fused single-pass path (small x, resident in VMEM).
    x1 = jax.random.normal(k1, (8, 4, 16, 16), dtype=jnp.float32)
    out1 = jax.block_until_ready(minibatch_std(x1, group_size=4, eps=1e-8))
    ref1 = _ref_minibatch_std(x1, group_size=4, eps=1e-8)
    assert out1.shape == (8, 5, 16, 16), out1.shape
    assert out1.dtype == x1.dtype
    assert jnp.allclose(out1, ref1, atol=1e-5, rtol=1e-5), "fused mismatch"

    # 2) group_size <= 0 -> whole batch is one group (M == 1 edge case).
    out1b = jax.block_until_ready(minibatch_std(x1, group_size=0, eps=1e-8))
    ref1b = _ref_minibatch_std(x1, group_size=0, eps=1e-8)
    assert jnp.allclose(out1b, ref1b, atol=1e-5, rtol=1e-5), "full-batch mismatch"

    # 3) Fused path with multiple grid steps and a partial last M tile
    #    (pl.cdiv grid), forced by a small tile budget.
    x3 = jax.random.normal(k3, (80, 4, 8, 8), dtype=jnp.float32)
    out3 = jax.block_until_ready(
        minibatch_std(x3, group_size=4, eps=1e-8, tile_budget_bytes=192 * 1024))
    ref3 = _ref_minibatch_std(x3, group_size=4, eps=1e-8)
    assert out3.shape == (80, 5, 8, 8), out3.shape
    assert jnp.allclose(out3, ref3, atol=1e-5, rtol=1e-5), "partial-tile mismatch"

    # 4) Forced two-pass fallback: tiled F reduction with masked short last
    #    F tile + batched lane-dense assemble.
    x2 = jax.random.normal(k2, (16, 8, 16, 32), dtype=jnp.float32)
    out2 = jax.block_until_ready(
        minibatch_std(x2, group_size=4, eps=1e-8,
                      force_two_pass=True, tile_budget_bytes=256 * 1024))
    ref2 = _ref_minibatch_std(x2, group_size=4, eps=1e-8)
    assert out2.shape == (16, 9, 16, 32), out2.shape
    assert out2.dtype == x2.dtype
    assert jnp.allclose(out2, ref2, atol=1e-5, rtol=1e-5), "two-pass mismatch"

    print("KERNEL_OK")
</pallas_src>

<mosaic_0001>
module attributes {stable_mosaic.version = 11 : i64} {
  func.func @kernel(%arg0: i32, %arg1: memref<4x2x1024xf32, #tpu.memory_space<vmem>>, %arg2: memref<4x2x1280xf32, #tpu.memory_space<vmem>>) attributes {dimension_semantics = [#tpu.dimension_semantics<parallel>], iteration_bounds = array<i64: 1>, scalar_prefetch = 0 : i64, scratch_operands = 0 : i64, tpu.core_type = #tpu.core_type<tc>, window_params = [{transform_indices = @transform_0, window_bounds = array<i64: 4, 2, 1024>}, {transform_indices = @transform_1, window_bounds = array<i64: 4, 2, 1280>}]} {
    %cst = arith.constant 0.000000e+00 : f32
    %0 = vector.broadcast %cst : f32 to vector<2x1024xf32>
    %c0_i32 = arith.constant 0 : i32
    %1 = arith.index_cast %c0_i32 : i32 to index
    %c0 = arith.constant 0 : index
    %c0_0 = arith.constant 0 : index
    %2 = vector.load %arg1[%1, %c0, %c0_0] : memref<4x2x1024xf32, #tpu.memory_space<vmem>>, vector<1x2x1024xf32>
    %3 = vector.shape_cast %2 : vector<1x2x1024xf32> to vector<2x1024xf32>
    %4 = arith.addf %0, %3 : vector<2x1024xf32>
    %c1_i32 = arith.constant 1 : i32
    %5 = arith.index_cast %c1_i32 : i32 to index
    %c0_1 = arith.constant 0 : index
    %c0_2 = arith.constant 0 : index
    %6 = vector.load %arg1[%5, %c0_1, %c0_2] : memref<4x2x1024xf32, #tpu.memory_space<vmem>>, vector<1x2x1024xf32>
    %7 = vector.shape_cast %6 : vector<1x2x1024xf32> to vector<2x1024xf32>
    %8 = arith.addf %4, %7 : vector<2x1024xf32>
    %c2_i32 = arith.constant 2 : i32
    %9 = arith.index_cast %c2_i32 : i32 to index
    %c0_3 = arith.constant 0 : index
    %c0_4 = arith.constant 0 : index
    %10 = vector.load %arg1[%9, %c0_3, %c0_4] : memref<4x2x1024xf32, #tpu.memory_space<vmem>>, vector<1x2x1024xf32>
    %11 = vector.shape_cast %10 : vector<1x2x1024xf32> to vector<2x1024xf32>
    %12 = arith.addf %8, %11 : vector<2x1024xf32>
    %c3_i32 = arith.constant 3 : i32
    %13 = arith.index_cast %c3_i32 : i32 to index
    %c0_5 = arith.constant 0 : index
    %c0_6 = arith.constant 0 : index
    %14 = vector.load %arg1[%13, %c0_5, %c0_6] : memref<4x2x1024xf32, #tpu.memory_space<vmem>>, vector<1x2x1024xf32>
    %15 = vector.shape_cast %14 : vector<1x2x1024xf32> to vector<2x1024xf32>
    %16 = arith.addf %12, %15 : vector<2x1024xf32>
    %c4_i32 = arith.constant 4 : i32
    %cst_7 = arith.constant 2.500000e-01 : f32
    %17 = vector.broadcast %cst_7 : f32 to vector<2x1024xf32>
    %18 = arith.mulf %16, %17 : vector<2x1024xf32>
    %c0_i32_8 = arith.constant 0 : i32
    %19 = arith.index_cast %c0_i32_8 : i32 to index
    %c0_9 = arith.constant 0 : index
    %c0_10 = arith.constant 0 : index
    %20 = vector.load %arg1[%19, %c0_9, %c0_10] : memref<4x2x1024xf32, #tpu.memory_space<vmem>>, vector<1x2x1024xf32>
    %21 = vector.shape_cast %20 : vector<1x2x1024xf32> to vector<2x1024xf32>
    %22 = arith.subf %21, %18 : vector<2x1024xf32>
    %23 = arith.mulf %22, %22 : vector<2x1024xf32>
    %24 = arith.addf %0, %23 : vector<2x1024xf32>
    %c1_i32_11 = arith.constant 1 : i32
    %25 = arith.index_cast %c1_i32_11 : i32 to index
    %c0_12 = arith.constant 0 : index
    %c0_13 = arith.constant 0 : index
    %26 = vector.load %arg1[%25, %c0_12, %c0_13] : memref<4x2x1024xf32, #tpu.memory_space<vmem>>, vector<1x2x1024xf32>
    %27 = vector.shape_cast %26 : vector<1x2x1024xf32> to vector<2x1024xf32>
    %28 = arith.subf %27, %18 : vector<2x1024xf32>
    %29 = arith.mulf %28, %28 : vector<2x1024xf32>
    %30 = arith.addf %24, %29 : vector<2x1024xf32>
    %c2_i32_14 = arith.constant 2 : i32
    %31 = arith.index_cast %c2_i32_14 : i32 to index
    %c0_15 = arith.constant 0 : index
    %c0_16 = arith.constant 0 : index
    %32 = vector.load %arg1[%31, %c0_15, %c0_16] : memref<4x2x1024xf32, #tpu.memory_space<vmem>>, vector<1x2x1024xf32>
    %33 = vector.shape_cast %32 : vector<1x2x1024xf32> to vector<2x1024xf32>
    %34 = arith.subf %33, %18 : vector<2x1024xf32>
    %35 = arith.mulf %34, %34 : vector<2x1024xf32>
    %36 = arith.addf %30, %35 : vector<2x1024xf32>
    %c3_i32_17 = arith.constant 3 : i32
    %37 = arith.index_cast %c3_i32_17 : i32 to index
    %c0_18 = arith.constant 0 : index
    %c0_19 = arith.constant 0 : index
    %38 = vector.load %arg1[%37, %c0_18, %c0_19] : memref<4x2x1024xf32, #tpu.memory_space<vmem>>, vector<1x2x1024xf32>
    %39 = vector.shape_cast %38 : vector<1x2x1024xf32> to vector<2x1024xf32>
    %40 = arith.subf %39, %18 : vector<2x1024xf32>
    %41 = arith.mulf %40, %40 : vector<2x1024xf32>
    %42 = arith.addf %36, %41 : vector<2x1024xf32>
    %c4_i32_20 = arith.constant 4 : i32
    %cst_21 = arith.constant 2.500000e-01 : f32
    %43 = vector.broadcast %cst_21 : f32 to vector<2x1024xf32>
    %44 = arith.mulf %42, %43 : vector<2x1024xf32>
    %cst_22 = arith.constant 9.99999993E-9 : f32
    %45 = vector.broadcast %cst_22 : f32 to vector<2x1024xf32>
    %46 = arith.addf %44, %45 : vector<2x1024xf32>
    %47 = math.sqrt %46 : vector<2x1024xf32>
    %cst_23 = arith.constant dense<0.000000e+00> : vector<2xf32>
    %48 = vector.multi_reduction <add>, %47, %cst_23 [1] : vector<2x1024xf32> to vector<2xf32>
    %49 = vector.shape_cast %48 : vector<2xf32> to vector<2x1xf32>
    %cst_24 = arith.constant 9.765625E-4 : f32
    %50 = vector.broadcast %cst_24 : f32 to vector<2x1xf32>
    %51 = arith.mulf %49, %50 : vector<2x1xf32>
    %52 = vector.shape_cast %51 : vector<2x1xf32> to vector<2x1xf32>
    %53 = vector.broadcast %52 : vector<2x1xf32> to vector<2x256xf32>
    %c0_25 = arith.constant 0 : index
    %c0_26 = arith.constant 0 : index
    %c0_27 = arith.constant 0 : index
    %54 = vector.load %arg1[%c0_25, %c0_26, %c0_27] : memref<4x2x1024xf32, #tpu.memory_space<vmem>>, vector<1x2x1024xf32>
    %55 = vector.shape_cast %54 : vector<1x2x1024xf32> to vector<2x1024xf32>
    %56 = tpu.concatenate %55, %53 in 1 : vector<2x1024xf32>, vector<2x256xf32> -> vector<2x1280xf32>
    %c0_28 = arith.constant 0 : index
    %c0_29 = arith.constant 0 : index
    %c0_30 = arith.constant 0 : index
    %57 = vector.load %arg2[%c0_28, %c0_29, %c0_30] : memref<4x2x1280xf32, #tpu.memory_space<vmem>>, vector<1x2x1280xf32>
    %58 = vector.shape_cast %57 : vector<1x2x1280xf32> to vector<2x1280xf32>
    %59 = vector.shape_cast %56 : vector<2x1280xf32> to vector<1x2x1280xf32>
    tpu.vector_store %arg2[%c0_28, %c0_29, %c0_30], %59 {strides = array<i32>} : memref<4x2x1280xf32, #tpu.memory_space<vmem>>, vector<1x2x1280xf32>,
    %c1 = arith.constant 1 : index
    %c0_31 = arith.constant 0 : index
    %c0_32 = arith.constant 0 : index
    %60 = vector.load %arg1[%c1, %c0_31, %c0_32] : memref<4x2x1024xf32, #tpu.memory_space<vmem>>, vector<1x2x1024xf32>
    %61 = vector.shape_cast %60 : vector<1x2x1024xf32> to vector<2x1024xf32>
    %62 = tpu.concatenate %61, %53 in 1 : vector<2x1024xf32>, vector<2x256xf32> -> vector<2x1280xf32>
    %c1_33 = arith.constant 1 : index
    %c0_34 = arith.constant 0 : index
    %c0_35 = arith.constant 0 : index
    %63 = vector.load %arg2[%c1_33, %c0_34, %c0_35] : memref<4x2x1280xf32, #tpu.memory_space<vmem>>, vector<1x2x1280xf32>
    %64 = vector.shape_cast %63 : vector<1x2x1280xf32> to vector<2x1280xf32>
    %65 = vector.shape_cast %62 : vector<2x1280xf32> to vector<1x2x1280xf32>
    tpu.vector_store %arg2[%c1_33, %c0_34, %c0_35], %65 {strides = array<i32>} : memref<4x2x1280xf32, #tpu.memory_space<vmem>>, vector<1x2x1280xf32>,
    %c2 = arith.constant 2 : index
    %c0_36 = arith.constant 0 : index
    %c0_37 = arith.constant 0 : index
    %66 = vector.load %arg1[%c2, %c0_36, %c0_37] : memref<4x2x1024xf32, #tpu.memory_space<vmem>>, vector<1x2x1024xf32>
    %67 = vector.shape_cast %66 : vector<1x2x1024xf32> to vector<2x1024xf32>
    %68 = tpu.concatenate %67, %53 in 1 : vector<2x1024xf32>, vector<2x256xf32> -> vector<2x1280xf32>
    %c2_38 = arith.constant 2 : index
    %c0_39 = arith.constant 0 : index
    %c0_40 = arith.constant 0 : index
    %69 = vector.load %arg2[%c2_38, %c0_39, %c0_40] : memref<4x2x1280xf32, #tpu.memory_space<vmem>>, vector<1x2x1280xf32>
    %70 = vector.shape_cast %69 : vector<1x2x1280xf32> to vector<2x1280xf32>
    %71 = vector.shape_cast %68 : vector<2x1280xf32> to vector<1x2x1280xf32>
    tpu.vector_store %arg2[%c2_38, %c0_39, %c0_40], %71 {strides = array<i32>} : memref<4x2x1280xf32, #tpu.memory_space<vmem>>, vector<1x2x1280xf32>,
    %c3 = arith.constant 3 : index
    %c0_41 = arith.constant 0 : index
    %c0_42 = arith.constant 0 : index
    %72 = vector.load %arg1[%c3, %c0_41, %c0_42] : memref<4x2x1024xf32, #tpu.memory_space<vmem>>, vector<1x2x1024xf32>
    %73 = vector.shape_cast %72 : vector<1x2x1024xf32> to vector<2x1024xf32>
    %74 = tpu.concatenate %73, %53 in 1 : vector<2x1024xf32>, vector<2x256xf32> -> vector<2x1280xf32>
    %c3_43 = arith.constant 3 : index
    %c0_44 = arith.constant 0 : index
    %c0_45 = arith.constant 0 : index
    %75 = vector.load %arg2[%c3_43, %c0_44, %c0_45] : memref<4x2x1280xf32, #tpu.memory_space<vmem>>, vector<1x2x1280xf32>
    %76 = vector.shape_cast %75 : vector<1x2x1280xf32> to vector<2x1280xf32>
    %77 = vector.shape_cast %74 : vector<2x1280xf32> to vector<1x2x1280xf32>
    tpu.vector_store %arg2[%c3_43, %c0_44, %c0_45], %77 {strides = array<i32>} : memref<4x2x1280xf32, #tpu.memory_space<vmem>>, vector<1x2x1280xf32>,
    return
  }
  func.func @transform_0(%arg0: i32) -> (i32, i32, i32) {
    %c0_i32 = arith.constant 0 : i32
    %c0_i32_0 = arith.constant 0 : i32
    %c0_i32_1 = arith.constant 0 : i32
    return %c0_i32, %arg0, %c0_i32_0 : i32, i32, i32
  }
  func.func @transform_1(%arg0: i32) -> (i32, i32, i32) {
    %c0_i32 = arith.constant 0 : i32
    %c0_i32_0 = arith.constant 0 : i32
    %c0_i32_1 = arith.constant 0 : i32
    return %c0_i32, %arg0, %c0_i32_0 : i32, i32, i32
  }
}

</mosaic_0001>

<llo_original>
// kernel: tpu_custom_call.1
$region0: #{tpu_custom_call.1}
  #allocation0 [shape = 'u32[]', space=smem, size = 0x4, offset = 0x4, fixed_abs, tag = 'smem constant byte address 0x4 - core index']
  #allocation1 [shape = 'u32[144,128]{1,0:T(1,128)}', space=vmem, size = 0x12000, scoped, tag = 'internal scratch']
  %s0 = inlined_call_operand.hbm [shape: f32[4,2,1024], index: 0, kind: input, shape index: {}]
  %s1 = inlined_call_operand.hbm [shape: f32[4,2,1280], index: 1, kind: output, shape index: {}]
  %s2 = sld [smem:[#allocation0]]
  $region18: #{tpu_custom_call.1} parent=0
    _
  %s4 = ssub.s32 1, %s2
  %s5 = scalar_select 0, %s4, %s2
  $region1: #{tpu_custom_call.1} parent=0
    #allocation2 [shape = 'u8[32768]{0}', space=vmem, size = 0x8000, scoped, tag = 'input window, operand 0, single buffered']
    #allocation3 [shape = 's32[1]{0}', space=sflag, size = 0x4, scoped, tag = 'scoped memory for tpu_custom_call.1']
    #allocation4 [shape = 's32[1]{0}', space=sflag, size = 0x4, scoped, tag = 'scoped memory for tpu_custom_call.1']
    #allocation5 [shape = 'u8[40960]{0}', space=vmem, size = 0xa000, scoped, tag = 'output window, operand 0, single buffered']
    %6 = vsyncpa [#allocation3], 0
    %7 = vsyncpa [#allocation4], 0
    // Predicated region
    $region2: #{tpu_custom_call.1} parent=1 // pred_check
      _
    $region3: #{tpu_custom_call.1} parent=1 // pred_check_branch
      %9 = sbr.rel (0) target = $region5
    $region4: #{tpu_custom_call.1} parent=1 // pred_region
      %s11 = ssub.s32 1024, 1024
      %12 = vsyncadd [#allocation3], %s11
      %s13 = sshll.u32 [#allocation2], 4
      %s14 = int_to_ptr.vmem [resolvable:$true] %s13
      %19 = dma.hbm_to_vmem [thread:$0]  %s0, 1024, %s14, [#allocation3], 256, 256, 16
    $region5: #{tpu_custom_call.1} parent=1 // pred_fallthru
      _
    // Predicated region
    $region6: #{tpu_custom_call.1} parent=1 // pred_check
      _
    $region7: #{tpu_custom_call.1} parent=1 // pred_check_branch
      %21 = sbr.rel (0) target = $region9
    $region8: #{tpu_custom_call.1} parent=1 // pred_region
      %22 = dma.done [#allocation3], 1024
    $region9: #{tpu_custom_call.1} parent=1 // pred_fallthru
      _
    %v23 = vld [vmem:[#allocation2] sm:$0xff]
    %v24 = vld [vmem:[#allocation2 + $0x8] sm:$0xff]
    %v25 = vadd.f32 %v23, 0.0
    %v26 = vadd.f32 %v24, 0.0
    %s27 = scalar_lea.vmem [#allocation2], 16
    %v28 = vld [vmem:[%s27] sm:$0xff]
    %v29 = vld [vmem:[%s27 + $0x8] sm:$0xff]
    %v30 = vadd.f32 %v25, %v28
    %v31 = vadd.f32 %v26, %v29
    %s32 = scalar_lea.vmem [#allocation2], 32
    %v33 = vld [vmem:[%s32] sm:$0xff]
    %v34 = vld [vmem:[%s32 + $0x8] sm:$0xff]
    %v35 = vadd.f32 %v30, %v33
    %v36 = vadd.f32 %v31, %v34
    %s37 = scalar_lea.vmem [#allocation2], 48
    %v38 = vld [vmem:[%s37] sm:$0xff]
    %v39 = vld [vmem:[%s37 + $0x8] sm:$0xff]
    %v40 = vadd.f32 %v35, %v38
    %v41 = vadd.f32 %v36, %v39
    %v42 = vmul.f32 %v40, 0.25
    %v43 = vmul.f32 %v41, 0.25
    %v44 = vsub.f32 %v23, %v42
    %v45 = vsub.f32 %v24, %v43
    %v46 = vmul.f32 %v44, %v44
    %v47 = vmul.f32 %v45, %v45
    %v48 = vadd.f32 %v46, 0.0
    %v49 = vadd.f32 %v47, 0.0
    %v50 = vsub.f32 %v28, %v42
    %v51 = vsub.f32 %v29, %v43
    %v52 = vmul.f32 %v50, %v50
    %v53 = vmul.f32 %v51, %v51
    %v54 = vadd.f32 %v48, %v52
    %v55 = vadd.f32 %v49, %v53
    %v56 = vsub.f32 %v33, %v42
    %v57 = vsub.f32 %v34, %v43
    %v58 = vmul.f32 %v56, %v56
    %v59 = vmul.f32 %v57, %v57
    %v60 = vadd.f32 %v54, %v58
    %v61 = vadd.f32 %v55, %v59
    %v62 = vsub.f32 %v38, %v42
    %v63 = vsub.f32 %v39, %v43
    %v64 = vmul.f32 %v62, %v62
    %v65 = vmul.f32 %v63, %v63
    %v66 = vadd.f32 %v60, %v64
    %v67 = vadd.f32 %v61, %v65
    %v68 = vmul.f32 %v66, 0.25
    %v69 = vmul.f32 %v67, 0.25
    %v70 = vadd.f32 %v68, 1e-08
    %v71 = vadd.f32 %v69, 1e-08
    %v72 = vrsqrt.pop %v70
    %v73 = vmul.f32 %v70, %v72
    %vm74 = vcmp.eq.f32.partialorder %v70, inf
    %v75 = vsel %vm74, %v70, %v73
    %vm76 = vcmp.eq.f32.partialorder %v70, 0.0
    %v77 = vand.u32 %v70, 2147483648
    %v78 = vsel %vm76, %v77, %v75
    %v79 = vrsqrt.pop %v71
    %v80 = vmul.f32 %v71, %v79
    %vm81 = vcmp.eq.f32.partialorder %v71, inf
    %v82 = vsel %vm81, %v71, %v80
    %vm83 = vcmp.eq.f32.partialorder %v71, 0.0
    %v84 = vand.u32 %v71, 2147483648
    %v85 = vsel %vm83, %v84, %v82
    %v88 = vcombine.high %v78, %v78
    %v90 = vunpack.c.l.s4 1983009808
    %v91 = vunpack.c.0.s8 %v90
    %v92 = vlaneseq
    %v93 = vshrl.u32 %v92, 7
    %v94 = vsub.s32 %v91, %v93
    %v95 = vrot.slane %v78, %v94
    %v97 = vunpack.c.l.s4 1983009808
    %v98 = vunpack.c.0.s8 %v97
    %v99 = vlaneseq
    %v100 = vshrl.u32 %v99, 7
    %v101 = vsub.s32 %v98, %v100
    %v102 = vrot.slane %v88, %v101
    %v103 = vcombine.high %v95, %v95
    %v104 = vcombine.high %v102, %v102
    %v105 = vcombine.high %v85, %v85
    %v107 = vunpack.c.l.s4 1983009808
    %v108 = vunpack.c.0.s8 %v107
    %v109 = vlaneseq
    %v110 = vshrl.u32 %v109, 7
    %v111 = vsub.s32 %v108, %v110
    %v112 = vrot.slane %v85, %v111
    %v114 = vunpack.c.l.s4 1983009808
    %v115 = vunpack.c.0.s8 %v114
    %v116 = vlaneseq
    %v117 = vshrl.u32 %v116, 7
    %v118 = vsub.s32 %v115, %v117
    %v119 = vrot.slane %v105, %v118
    %v120 = vcombine.high %v112, %v112
    %v121 = vcombine.high %v119, %v119
    %vm130 = vcmask 1041408
    %v131 = vsel %vm130, %v95, 0.0
    %v132 = vsel %vm130, %v103, 0.0
    %v133 = vadd.f32 %v131, %v132
    %v134 = vsel %vm130, %v102, 0.0
    %v135 = vadd.f32 %v133, %v134
    %v136 = vsel %vm130, %v104, 0.0
    %v137 = vadd.f32 %v135, %v136
    %v138 = vsel %vm130, %v112, 0.0
    %v139 = vadd.f32 %v137, %v138
    %v140 = vsel %vm130, %v120, 0.0
    %v141 = vadd.f32 %v139, %v140
    %v142 = vsel %vm130, %v119, 0.0
    %v143 = vadd.f32 %v141, %v142
    %v144 = vsel %vm130, %v121, 0.0
    %v145 = vadd.f32 %v143, %v144
    %146 = vadd.xlane.f32.xlu0 %v145
    %v147 = vpop.xlane.xlu0 %146
    %v148 = vmul.f32 %v147, 0.0009765625
    %v151 = vcombine.high %v23, %v23
    %v153 = vunpack.c.l.s4 1983009808
    %v154 = vunpack.c.0.s8 %v153
    %v155 = vlaneseq
    %v156 = vshrl.u32 %v155, 7
    %v157 = vsub.s32 %v154, %v156
    %v158 = vrot.slane %v23, %v157
    %v160 = vunpack.c.l.s4 1983009808
    %v161 = vunpack.c.0.s8 %v160
    %v162 = vlaneseq
    %v163 = vshrl.u32 %v162, 7
    %v164 = vsub.s32 %v161, %v163
    %v165 = vrot.slane %v151, %v164
    %v166 = vcombine.high %v158, %v158
    %v167 = vcombine.high %v165, %v165
    %v168 = vcombine.high %v24, %v24
    %v170 = vunpack.c.l.s4 1983009808
    %v171 = vunpack.c.0.s8 %v170
    %v172 = vlaneseq
    %v173 = vshrl.u32 %v172, 7
    %v174 = vsub.s32 %v171, %v173
    %v175 = vrot.slane %v24, %v174
    %v177 = vunpack.c.l.s4 1983009808
    %v178 = vunpack.c.0.s8 %v177
    %v179 = vlaneseq
    %v180 = vshrl.u32 %v179, 7
    %v181 = vsub.s32 %v178, %v180
    %v182 = vrot.slane %v168, %v181
    %v183 = vcombine.high %v175, %v175
    %v184 = vcombine.high %v182, %v182
    %v186 = vcombine.low %v158, %v166
    %v187 = vcombine.low %v165, %v167
    %v189 = vunpack.c.l.s4 1983009808
    %v190 = vunpack.c.0.s8 %v189
    %v191 = vlaneseq
    %v192 = vshrl.u32 %v191, 7
    %v193 = vsub.s32 %v190, %v192
    %v194 = vrot.slane %v186, %v193
    %v196 = vunpack.c.l.s4 1983009808
    %v197 = vunpack.c.0.s8 %v196
    %v198 = vlaneseq
    %v199 = vshrl.u32 %v198, 7
    %v200 = vsub.s32 %v197, %v199
    %v201 = vrot.slane %v187, %v200
    %v202 = vcombine.low %v194, %v201
    %v203 = vcombine.low %v175, %v183
    %v204 = vcombine.low %v182, %v184
    %v206 = vunpack.c.l.s4 1983009808
    %v207 = vunpack.c.0.s8 %v206
    %v208 = vlaneseq
    %v209 = vshrl.u32 %v208, 7
    %v210 = vsub.s32 %v207, %v209
    %v211 = vrot.slane %v203, %v210
    %v213 = vunpack.c.l.s4 1983009808
    %v214 = vunpack.c.0.s8 %v213
    %v215 = vlaneseq
    %v216 = vshrl.u32 %v215, 7
    %v217 = vsub.s32 %v214, %v216
    %v218 = vrot.slane %v204, %v217
    %v219 = vcombine.low %v211, %v218
    %v220 = vcombine.low %v148, %v148
    %v222 = vunpack.c.l.s4 1983009808
    %v223 = vunpack.c.0.s8 %v222
    %v224 = vlaneseq
    %v225 = vshrl.u32 %v224, 7
    %v226 = vsub.s32 %v223, %v225
    %v227 = vrot.slane %v220, %v226
    %231 = vst [vmem:[#allocation5] sm:$0xff] %v202
    %232 = vst [vmem:[#allocation5 + $0x8] sm:$0xff] %v219
    %233 = vst [vmem:[#allocation5 + $0x10] sm:$0xf] %v227
    %v234 = vld [vmem:[%s27] sm:$0xff]
    %v235 = vld [vmem:[%s27 + $0x8] sm:$0xff]
    %v238 = vcombine.high %v234, %v234
    %v240 = vunpack.c.l.s4 1983009808
    %v241 = vunpack.c.0.s8 %v240
    %v242 = vlaneseq
    %v243 = vshrl.u32 %v242, 7
    %v244 = vsub.s32 %v241, %v243
    %v245 = vrot.slane %v234, %v244
    %v247 = vunpack.c.l.s4 1983009808
    %v248 = vunpack.c.0.s8 %v247
    %v249 = vlaneseq
    %v250 = vshrl.u32 %v249, 7
    %v251 = vsub.s32 %v248, %v250
    %v252 = vrot.slane %v238, %v251
    %v253 = vcombine.high %v245, %v245
    %v254 = vcombine.high %v252, %v252
    %v255 = vcombine.high %v235, %v235
    %v257 = vunpack.c.l.s4 1983009808
    %v258 = vunpack.c.0.s8 %v257
    %v259 = vlaneseq
    %v260 = vshrl.u32 %v259, 7
    %v261 = vsub.s32 %v258, %v260
    %v262 = vrot.slane %v235, %v261
    %v264 = vunpack.c.l.s4 1983009808
    %v265 = vunpack.c.0.s8 %v264
    %v266 = vlaneseq
    %v267 = vshrl.u32 %v266, 7
    %v268 = vsub.s32 %v265, %v267
    %v269 = vrot.slane %v255, %v268
    %v270 = vcombine.high %v262, %v262
    %v271 = vcombine.high %v269, %v269
    %v272 = vcombine.low %v245, %v253
    %v273 = vcombine.low %v252, %v254
    %v275 = vunpack.c.l.s4 1983009808
    %v276 = vunpack.c.0.s8 %v275
    %v277 = vlaneseq
    %v278 = vshrl.u32 %v277, 7
    %v279 = vsub.s32 %v276, %v278
    %v280 = vrot.slane %v272, %v279
    %v282 = vunpack.c.l.s4 1983009808
    %v283 = vunpack.c.0.s8 %v282
    %v284 = vlaneseq
    %v285 = vshrl.u32 %v284, 7
    %v286 = vsub.s32 %v283, %v285
    %v287 = vrot.slane %v273, %v286
    %v288 = vcombine.low %v280, %v287
    %v289 = vcombine.low %v262, %v270
    %v290 = vcombine.low %v269, %v271
    %v292 = vunpack.c.l.s4 1983009808
    %v293 = vunpack.c.0.s8 %v292
    %v294 = vlaneseq
    %v295 = vshrl.u32 %v294, 7
    %v296 = vsub.s32 %v293, %v295
    %v297 = vrot.slane %v289, %v296
    %v299 = vunpack.c.l.s4 1983009808
    %v300 = vunpack.c.0.s8 %v299
    %v301 = vlaneseq
    %v302 = vshrl.u32 %v301, 7
    %v303 = vsub.s32 %v300, %v302
    %v304 = vrot.slane %v290, %v303
    %v305 = vcombine.low %v297, %v304
    %s308 = scalar_lea.vmem [#allocation5], 20
    %309 = vst [vmem:[%s308] sm:$0xff] %v288
    %310 = vst [vmem:[%s308 + $0x8] sm:$0xff] %v305
    %311 = vst [vmem:[%s308 + $0x10] sm:$0xf] %v227
    %v312 = vld [vmem:[%s32] sm:$0xff]
    %v313 = vld [vmem:[%s32 + $0x8] sm:$0xff]
    %v316 = vcombine.high %v312, %v312
    %v318 = vunpack.c.l.s4 1983009808
    %v319 = vunpack.c.0.s8 %v318
    %v320 = vlaneseq
    %v321 = vshrl.u32 %v320, 7
    %v322 = vsub.s32 %v319, %v321
    %v323 = vrot.slane %v312, %v322
    %v325 = vunpack.c.l.s4 1983009808
    %v326 = vunpack.c.0.s8 %v325
    %v327 = vlaneseq
    %v328 = vshrl.u32 %v327, 7
    %v329 = vsub.s32 %v326, %v328
    %v330 = vrot.slane %v316, %v329
    %v331 = vcombine.high %v323, %v323
    %v332 = vcombine.high %v330, %v330
    %v333 = vcombine.high %v313, %v313
    %v335 = vunpack.c.l.s4 1983009808
    %v336 = vunpack.c.0.s8 %v335
    %v337 = vlaneseq
    %v338 = vshrl.u32 %v337, 7
    %v339 = vsub.s32 %v336, %v338
    %v340 = vrot.slane %v313, %v339
    %v342 = vunpack.c.l.s4 1983009808
    %v343 = vunpack.c.0.s8 %v342
    %v344 = vlaneseq
    %v345 = vshrl.u32 %v344, 7
    %v346 = vsub.s32 %v343, %v345
    %v347 = vrot.slane %v333, %v346
    %v348 = vcombine.high %v340, %v340
    %v349 = vcombine.high %v347, %v347
    %v350 = vcombine.low %v323, %v331
    %v351 = vcombine.low %v330, %v332
    %v353 = vunpack.c.l.s4 1983009808
    %v354 = vunpack.c.0.s8 %v353
    %v355 = vlaneseq
    %v356 = vshrl.u32 %v355, 7
    %v357 = vsub.s32 %v354, %v356
    %v358 = vrot.slane %v350, %v357
    %v360 = vunpack.c.l.s4 1983009808
    %v361 = vunpack.c.0.s8 %v360
    %v362 = vlaneseq
    %v363 = vshrl.u32 %v362, 7
    %v364 = vsub.s32 %v361, %v363
    %v365 = vrot.slane %v351, %v364
    %v366 = vcombine.low %v358, %v365
    %v367 = vcombine.low %v340, %v348
    %v368 = vcombine.low %v347, %v349
    %v370 = vunpack.c.l.s4 1983009808
    %v371 = vunpack.c.0.s8 %v370
    %v372 = vlaneseq
    %v373 = vshrl.u32 %v372, 7
    %v374 = vsub.s32 %v371, %v373
    %v375 = vrot.slane %v367, %v374
    %v377 = vunpack.c.l.s4 1983009808
    %v378 = vunpack.c.0.s8 %v377
    %v379 = vlaneseq
    %v380 = vshrl.u32 %v379, 7
    %v381 = vsub.s32 %v378, %v380
    %v382 = vrot.slane %v368, %v381
    %v383 = vcombine.low %v375, %v382
    %s386 = scalar_lea.vmem [#allocation5], 40
    %387 = vst [vmem:[%s386] sm:$0xff] %v366
    %388 = vst [vmem:[%s386 + $0x8] sm:$0xff] %v383
    %389 = vst [vmem:[%s386 + $0x10] sm:$0xf] %v227
    %v390 = vld [vmem:[%s37] sm:$0xff]
    %v391 = vld [vmem:[%s37 + $0x8] sm:$0xff]
    %v394 = vcombine.high %v390, %v390
    %v396 = vunpack.c.l.s4 1983009808
    %v397 = vunpack.c.0.s8 %v396
    %v398 = vlaneseq
    %v399 = vshrl.u32 %v398, 7
    %v400 = vsub.s32 %v397, %v399
    %v401 = vrot.slane %v390, %v400
    %v403 = vunpack.c.l.s4 1983009808
    %v404 = vunpack.c.0.s8 %v403
    %v405 = vlaneseq
    %v406 = vshrl.u32 %v405, 7
    %v407 = vsub.s32 %v404, %v406
    %v408 = vrot.slane %v394, %v407
    %v409 = vcombine.high %v401, %v401
    %v410 = vcombine.high %v408, %v408
    %v411 = vcombine.high %v391, %v391
    %v413 = vunpack.c.l.s4 1983009808
    %v414 = vunpack.c.0.s8 %v413
    %v415 = vlaneseq
    %v416 = vshrl.u32 %v415, 7
    %v417 = vsub.s32 %v414, %v416
    %v418 = vrot.slane %v391, %v417
    %v420 = vunpack.c.l.s4 1983009808
    %v421 = vunpack.c.0.s8 %v420
    %v422 = vlaneseq
    %v423 = vshrl.u32 %v422, 7
    %v424 = vsub.s32 %v421, %v423
    %v425 = vrot.slane %v411, %v424
    %v426 = vcombine.high %v418, %v418
    %v427 = vcombine.high %v425, %v425
    %v428 = vcombine.low %v401, %v409
    %v429 = vcombine.low %v408, %v410
    %v431 = vunpack.c.l.s4 1983009808
    %v432 = vunpack.c.0.s8 %v431
    %v433 = vlaneseq
    %v434 = vshrl.u32 %v433, 7
    %v435 = vsub.s32 %v432, %v434
    %v436 = vrot.slane %v428, %v435
    %v438 = vunpack.c.l.s4 1983009808
    %v439 = vunpack.c.0.s8 %v438
    %v440 = vlaneseq
    %v441 = vshrl.u32 %v440, 7
    %v442 = vsub.s32 %v439, %v441
    %v443 = vrot.slane %v429, %v442
    %v444 = vcombine.low %v436, %v443
    %v445 = vcombine.low %v418, %v426
    %v446 = vcombine.low %v425, %v427
    %v448 = vunpack.c.l.s4 1983009808
    %v449 = vunpack.c.0.s8 %v448
    %v450 = vlaneseq
    %v451 = vshrl.u32 %v450, 7
    %v452 = vsub.s32 %v449, %v451
    %v453 = vrot.slane %v445, %v452
    %v455 = vunpack.c.l.s4 1983009808
    %v456 = vunpack.c.0.s8 %v455
    %v457 = vlaneseq
    %v458 = vshrl.u32 %v457, 7
    %v459 = vsub.s32 %v456, %v458
    %v460 = vrot.slane %v446, %v459
    %v461 = vcombine.low %v453, %v460
    %s464 = scalar_lea.vmem [#allocation5], 60
    %465 = vst [vmem:[%s464] sm:$0xff] %v444
    %466 = vst [vmem:[%s464 + $0x8] sm:$0xff] %v461
    %467 = vst [vmem:[%s464 + $0x10] sm:$0xf] %v227
    // Predicated region
    $region10: #{tpu_custom_call.1} parent=1 // pred_check
      _
    $region11: #{tpu_custom_call.1} parent=1 // pred_check_branch
      %469 = sbr.rel (0) target = $region13
    $region12: #{tpu_custom_call.1} parent=1 // pred_region
      %s471 = ssub.s32 1280, 1280
      %472 = vsyncadd [#allocation4], %s471
      %s473 = sshll.u32 [#allocation5], 4
      %s474 = int_to_ptr.vmem [resolvable:$true] %s473
      %479 = dma.vmem_to_hbm [thread:$0]  %s474, 1280, %s1, [#allocation4], 320, 320, 20
    $region13: #{tpu_custom_call.1} parent=1 // pred_fallthru
      _
    // Predicated region
    $region14: #{tpu_custom_call.1} parent=1 // pred_check
      _
    $region15: #{tpu_custom_call.1} parent=1 // pred_check_branch
      %481 = sbr.rel (0) target = $region17
    $region16: #{tpu_custom_call.1} parent=1 // pred_region
      %482 = dma.done [#allocation4], 1280
    $region17: #{tpu_custom_call.1} parent=1 // pred_fallthru
      _
    %483 = vsyncpa [#allocation3], 1
    %484 = vsyncpa [#allocation4], 1

</llo_original>
